<compile_context>
chip_gen: v7x
topology: tpu7x:2x2x1
jax: 0.10.0
libtpu: 0.0.40
codegen_flags: <defaults>
</compile_context>

<pallas_src>
import functools

import jax
import jax.numpy as jnp
from jax.experimental import pallas as pl
from jax.experimental.pallas import tpu as pltpu

EPS = 1e-5
LANE = 128
# v7x-safe cap (64 MiB physical per TensorCore); on v5e/v6e (128 MiB VMEM)
# this can be raised toward 64-100 MiB for larger per-step blocks.
VMEM_LIMIT_BYTES = 48 * 1024 * 1024


def _round_up(x, m):
    return (x + m - 1) // m * m


def _resident_spec(block_shape):
    # BlockSpec for a grid-constant operand: same block every step, so request
    # single buffering (no point double-buffering a resident tile).  Fall back
    # to a default spec if this JAX version rejects pipeline_mode/Buffered(1).
    index_map = lambda i: (0,) * len(block_shape)
    try:
        return pl.BlockSpec(block_shape, index_map,
                            pipeline_mode=pl.Buffered(1))
    except (TypeError, ValueError, AttributeError, NotImplementedError):
        return pl.BlockSpec(block_shape, index_map)


# ---------------------------------------------------------------------------
# In-kernel patch construction + conv + bias + ReLU (shared by both passes).
# ---------------------------------------------------------------------------
def _build_patches(ph_ref, *, oh, ow, cin, ksize, stride, kpad, dtype):
    # ph_ref: [1, stride*stride, HPH, WPH, Cin] -- parity phases of the zero-
    # padded image.  Tap (kh, kw) is a CONTIGUOUS static slice of phase
    # (kh % stride, kw % stride); no strided access, no im2col HBM matrix.
    taps = []
    for kh in range(ksize):
        for kw in range(ksize):
            p = (kh % stride) * stride + (kw % stride)
            dh, dw = kh // stride, kw // stride
            taps.append(ph_ref[0, p, dh:dh + oh, dw:dw + ow, :])  # [OH, OW, Cin]
    k = ksize * ksize * cin
    if kpad > k:  # pad K to the dtype's sublane packing (8 f32 / 16 bf16)
        taps.append(jnp.zeros((oh, ow, kpad - k), dtype))
    patches = jnp.concatenate(taps, axis=-1)                      # [OH, OW, Kpad]
    return patches.reshape(oh * ow, kpad)


def _conv_bias_relu(ph_ref, w_ref, b_ref, *, oh, ow, cin, ksize, stride, kpad,
                    dtype):
    patches = _build_patches(ph_ref, oh=oh, ow=ow, cin=cin, ksize=ksize,
                             stride=stride, kpad=kpad, dtype=dtype)
    y = jnp.dot(patches, w_ref[...], preferred_element_type=jnp.float32)
    return jnp.maximum(y + b_ref[...], 0.0)                       # [OH*OW, Cpad] f32


# ---------------------------------------------------------------------------
# Pass 1: conv + bias + ReLU, emit only per-image [sum, sum_sq] partials.
# ---------------------------------------------------------------------------
def _stats_kernel(ph_ref, w_ref, b_ref, stats_ref, *, oh, ow, cin, ksize,
                  stride, kpad, dtype):
    y = _conv_bias_relu(ph_ref, w_ref, b_ref, oh=oh, ow=ow, cin=cin,
                        ksize=ksize, stride=stride, kpad=kpad, dtype=dtype)
    # Two direct row stores (no concatenate relayout).
    stats_ref[0, 0:1, :] = jnp.sum(y, axis=0, keepdims=True)
    stats_ref[0, 1:2, :] = jnp.sum(y * y, axis=0, keepdims=True)


# ---------------------------------------------------------------------------
# Pass 2: recompute conv + bias + ReLU, apply folded BN affine, single write.
# ---------------------------------------------------------------------------
def _apply_kernel(ph_ref, w_ref, b_ref, scale_ref, shift_ref, o_ref, *, oh, ow,
                  cin, ksize, stride, kpad, dtype):
    y = _conv_bias_relu(ph_ref, w_ref, b_ref, oh=oh, ow=ow, cin=cin,
                        ksize=ksize, stride=stride, kpad=kpad, dtype=dtype)
    o_ref[0] = (y * scale_ref[...] + shift_ref[...]).astype(o_ref.dtype)


def conv_block_forward(x_nchw, w_oihw, bias, gamma, beta, stride=2,
                       compute_dtype=jnp.bfloat16, out_dtype=None):
    # x_nchw: [N, Cin, H, W], w_oihw: [Cout, Cin, 3, 3]  (PyTorch conventions)
    n, cin, h, w = x_nchw.shape
    cout, _, ksize, _ = w_oihw.shape
    pad = 1
    oh = (h + 2 * pad - ksize) // stride + 1
    ow = (w + 2 * pad - ksize) // stride + 1
    m_img = oh * ow
    m_total = n * m_img
    out_dtype = x_nchw.dtype if out_dtype is None else out_dtype
    itemsize = jnp.dtype(compute_dtype).itemsize

    # -- input prep (one small fused XLA pass over the activation) -----------
    # NCHW->NHWC, zero pad, split into stride*stride parity phases so the
    # kernel's taps are contiguous slices.  Phases partition the input (no
    # inflation).  TODO(synk): accept NHWC inputs directly to drop the
    # activation-sized transpose pass as well.
    hp = _round_up(max(h + 2 * pad, (oh - 1) * stride + ksize), stride)
    wp = _round_up(max(w + 2 * pad, (ow - 1) * stride + ksize), stride)
    x_nhwc = jnp.transpose(x_nchw, (0, 2, 3, 1))
    xp = jnp.pad(x_nhwc, ((0, 0), (pad, hp - h - pad), (pad, wp - w - pad),
                          (0, 0)))
    phases = jnp.stack(
        [xp[:, ph::stride, pw::stride, :]
         for ph in range(stride) for pw in range(stride)],
        axis=1).astype(compute_dtype)             # [N, s*s, HPH, WPH, Cin]
    hph, wph = hp // stride, wp // stride

    # -- weights / bias (K sublane-packed per dtype, Cout lane-dense) --------
    k = ksize * ksize * cin
    sublane_pack = max(1, 4 // itemsize) * 8      # 8 f32, 16 bf16, 32 int8
    kpad = _round_up(k, sublane_pack)
    cpad = _round_up(cout, LANE)                  # a Cout>=256 stays one block
    w_mat = jnp.transpose(w_oihw, (2, 3, 1, 0)).reshape(k, cout)
    w_p = jnp.pad(w_mat, ((0, kpad - k), (0, cpad - cout))).astype(compute_dtype)
    b_p = jnp.pad(bias.astype(jnp.float32), (0, cpad - cout)).reshape(1, cpad)

    # -- VMEM budget check (whole image per grid step) ------------------------
    per_step = (2 * stride * stride * hph * wph * cin * itemsize     # in (2-buf)
                + 2 * m_img * cpad * jnp.dtype(out_dtype).itemsize   # out (2-buf)
                + kpad * cpad * itemsize + 4 * cpad * 4              # resident
                + m_img * (kpad + 2 * cpad) * 4)                     # live values
    if per_step > VMEM_LIMIT_BYTES:
        # TODO(synk): tile OH into halo-free row bands for very large images.
        raise ValueError(f"per-step working set {per_step} B exceeds VMEM budget")

    kern_kw = dict(oh=oh, ow=ow, cin=cin, ksize=ksize, stride=stride,
                   kpad=kpad, dtype=compute_dtype)
    phase_spec = pl.BlockSpec((1, stride * stride, hph, wph, cin),
                              lambda i: (i, 0, 0, 0, 0))
    cparams = pltpu.CompilerParams(
        dimension_semantics=("parallel",),        # images shard over TCs (v7x)
        vmem_limit_bytes=VMEM_LIMIT_BYTES)

    flops = 2 * m_total * kpad * cpad
    in_bytes = phases.size * itemsize + kpad * cpad * itemsize + cpad * 4

    stats = pl.pallas_call(
        functools.partial(_stats_kernel, **kern_kw),
        grid=(n,),
        in_specs=[phase_spec,
                  _resident_spec((kpad, cpad)),
                  _resident_spec((1, cpad))],
        out_specs=pl.BlockSpec((1, 2, cpad), lambda i: (i, 0, 0)),
        out_shape=jax.ShapeDtypeStruct((n, 2, cpad), jnp.float32),
        compiler_params=cparams,
        cost_estimate=pl.CostEstimate(flops=flops, transcendentals=0,
                                      bytes_accessed=in_bytes + n * 2 * cpad * 4),
    )(phases, w_p, b_p)

    # -- tiny per-channel reduction + BN affine folding (plain JAX) ----------
    # NOTE: E[y^2]-E[y]^2 in f32 (clamped at 0); switch to a centered second
    # pass if extreme M / dynamic range ever demands it.
    ssum = jnp.sum(stats[:, 0, :], axis=0)
    ssq = jnp.sum(stats[:, 1, :], axis=0)
    mean = ssum / m_total
    var = jnp.maximum(ssq / m_total - mean * mean, 0.0)   # biased, as torch BN
    gamma_p = jnp.pad(gamma.astype(jnp.float32), (0, cpad - cout))
    beta_p = jnp.pad(beta.astype(jnp.float32), (0, cpad - cout))
    scale = (gamma_p * jax.lax.rsqrt(var + EPS)).reshape(1, cpad)
    shift = (beta_p - mean * scale[0]).reshape(1, cpad)

    out_flat = pl.pallas_call(
        functools.partial(_apply_kernel, **kern_kw),
        grid=(n,),
        in_specs=[phase_spec,
                  _resident_spec((kpad, cpad)),
                  _resident_spec((1, cpad)),
                  _resident_spec((1, cpad)),
                  _resident_spec((1, cpad))],
        out_specs=pl.BlockSpec((1, m_img, cpad), lambda i: (i, 0, 0)),
        out_shape=jax.ShapeDtypeStruct((n, m_img, cpad), out_dtype),
        compiler_params=cparams,
        cost_estimate=pl.CostEstimate(
            flops=flops, transcendentals=0,
            bytes_accessed=in_bytes + 2 * cpad * 4
            + n * m_img * cpad * jnp.dtype(out_dtype).itemsize),
    )(phases, w_p, b_p, scale, shift)

    # Slice away channel padding; return NCHW to match the PyTorch module.
    # TODO(synk): keep NHWC (skip this transpose) when the consumer allows it.
    out = out_flat[:, :, :cout].reshape(n, oh, ow, cout)
    return jnp.transpose(out, (0, 3, 1, 2))


def reference_forward(x_nchw, w_oihw, bias, gamma, beta, stride=2):
    # Pure-JAX reference for correctness checking.
    y = jax.lax.conv_general_dilated(
        x_nchw, w_oihw, window_strides=(stride, stride),
        padding=((1, 1), (1, 1)),
        dimension_numbers=("NCHW", "OIHW", "NCHW"),
    ) + bias.reshape(1, -1, 1, 1)
    y = jnp.maximum(y, 0.0)
    mean = jnp.mean(y, axis=(0, 2, 3), keepdims=True)
    var = jnp.mean((y - mean) ** 2, axis=(0, 2, 3), keepdims=True)
    return gamma.reshape(1, -1, 1, 1) * (y - mean) * jax.lax.rsqrt(var + EPS) \
        + beta.reshape(1, -1, 1, 1)


if __name__ == "__main__":
    key = jax.random.PRNGKey(0)
    kx, kw, kb, kg, kbe = jax.random.split(key, 5)

    N, INC, OUTC, H, W = 2, 4, 8, 16, 16
    STRIDE = 2

    x = jax.random.normal(kx, (N, INC, H, W), dtype=jnp.float32)
    w = jax.random.normal(kw, (OUTC, INC, 3, 3), dtype=jnp.float32) * 0.1
    b = jax.random.normal(kb, (OUTC,), dtype=jnp.float32) * 0.1
    gamma = 1.0 + 0.1 * jax.random.normal(kg, (OUTC,), dtype=jnp.float32)
    beta = 0.1 * jax.random.normal(kbe, (OUTC,), dtype=jnp.float32)

    ref = jax.block_until_ready(
        reference_forward(x, w, b, gamma, beta, stride=STRIDE))

    # Exact-precision path (f32 MXU inputs): tight correctness check.
    out_f32 = jax.block_until_ready(
        conv_block_forward(x, w, b, gamma, beta, stride=STRIDE,
                           compute_dtype=jnp.float32))
    assert out_f32.shape == (N, OUTC, H // STRIDE, W // STRIDE), out_f32.shape
    err_f32 = float(jnp.max(jnp.abs(out_f32 - ref)))
    assert err_f32 < 1e-4, err_f32

    # Fast path (bf16 MXU inputs, f32 accumulation + f32 epilogue): loose check.
    out_bf16 = jax.block_until_ready(
        conv_block_forward(x, w, b, gamma, beta, stride=STRIDE,
                           compute_dtype=jnp.bfloat16))
    assert out_bf16.shape == (N, OUTC, H // STRIDE, W // STRIDE), out_bf16.shape
    err_bf16 = float(jnp.max(jnp.abs(out_bf16 - ref)))
    assert err_bf16 < 2.5e-1, err_bf16

    print("KERNEL_OK")
</pallas_src>

<mosaic_0001>
module attributes {stable_mosaic.version = 11 : i64} {
  func.func @_stats_kernel(%arg0: i32, %arg1: memref<1x4x9x9x4xf32, #tpu.memory_space<vmem>>, %arg2: memref<40x128xf32, #tpu.memory_space<vmem>>, %arg3: memref<1x128xf32, #tpu.memory_space<vmem>>, %arg4: memref<1x2x128xf32, #tpu.memory_space<vmem>>) attributes {dimension_semantics = [#tpu.dimension_semantics<parallel>], iteration_bounds = array<i64: 2>, scalar_prefetch = 0 : i64, scratch_operands = 0 : i64, tpu.core_type = #tpu.core_type<tc>, window_params = [{transform_indices = @transform_0, window_bounds = array<i64: 1, 4, 9, 9, 4>}, {pipeline_mode = #tpu.pipeline_mode<synchronous>, transform_indices = @transform_1, window_bounds = array<i64: 40, 128>}, {pipeline_mode = #tpu.pipeline_mode<synchronous>, transform_indices = @transform_2, window_bounds = array<i64: 1, 128>}, {transform_indices = @transform_3, window_bounds = array<i64: 1, 2, 128>}]} {
    %c0 = arith.constant 0 : index
    %c0_0 = arith.constant 0 : index
    %c0_1 = arith.constant 0 : index
    %c0_2 = arith.constant 0 : index
    %c0_3 = arith.constant 0 : index
    %0 = vector.load %arg1[%c0, %c0_0, %c0_1, %c0_2, %c0_3] : memref<1x4x9x9x4xf32, #tpu.memory_space<vmem>>, vector<1x1x8x8x4xf32>
    %1 = vector.shape_cast %0 : vector<1x1x8x8x4xf32> to vector<8x8x4xf32>
    %c0_4 = arith.constant 0 : index
    %c1 = arith.constant 1 : index
    %c0_5 = arith.constant 0 : index
    %c0_6 = arith.constant 0 : index
    %c0_7 = arith.constant 0 : index
    %2 = vector.load %arg1[%c0_4, %c1, %c0_5, %c0_6, %c0_7] : memref<1x4x9x9x4xf32, #tpu.memory_space<vmem>>, vector<1x1x8x8x4xf32>
    %3 = vector.shape_cast %2 : vector<1x1x8x8x4xf32> to vector<8x8x4xf32>
    %c0_8 = arith.constant 0 : index
    %c0_9 = arith.constant 0 : index
    %c0_10 = arith.constant 0 : index
    %c1_11 = arith.constant 1 : index
    %c0_12 = arith.constant 0 : index
    %4 = vector.load %arg1[%c0_8, %c0_9, %c0_10, %c1_11, %c0_12] : memref<1x4x9x9x4xf32, #tpu.memory_space<vmem>>, vector<1x1x8x8x4xf32>
    %5 = vector.shape_cast %4 : vector<1x1x8x8x4xf32> to vector<8x8x4xf32>
    %c0_13 = arith.constant 0 : index
    %c2 = arith.constant 2 : index
    %c0_14 = arith.constant 0 : index
    %c0_15 = arith.constant 0 : index
    %c0_16 = arith.constant 0 : index
    %6 = vector.load %arg1[%c0_13, %c2, %c0_14, %c0_15, %c0_16] : memref<1x4x9x9x4xf32, #tpu.memory_space<vmem>>, vector<1x1x8x8x4xf32>
    %7 = vector.shape_cast %6 : vector<1x1x8x8x4xf32> to vector<8x8x4xf32>
    %c0_17 = arith.constant 0 : index
    %c3 = arith.constant 3 : index
    %c0_18 = arith.constant 0 : index
    %c0_19 = arith.constant 0 : index
    %c0_20 = arith.constant 0 : index
    %8 = vector.load %arg1[%c0_17, %c3, %c0_18, %c0_19, %c0_20] : memref<1x4x9x9x4xf32, #tpu.memory_space<vmem>>, vector<1x1x8x8x4xf32>
    %9 = vector.shape_cast %8 : vector<1x1x8x8x4xf32> to vector<8x8x4xf32>
    %c0_21 = arith.constant 0 : index
    %c2_22 = arith.constant 2 : index
    %c0_23 = arith.constant 0 : index
    %c1_24 = arith.constant 1 : index
    %c0_25 = arith.constant 0 : index
    %10 = vector.load %arg1[%c0_21, %c2_22, %c0_23, %c1_24, %c0_25] : memref<1x4x9x9x4xf32, #tpu.memory_space<vmem>>, vector<1x1x8x8x4xf32>
    %11 = vector.shape_cast %10 : vector<1x1x8x8x4xf32> to vector<8x8x4xf32>
    %c0_26 = arith.constant 0 : index
    %c0_27 = arith.constant 0 : index
    %c1_28 = arith.constant 1 : index
    %c0_29 = arith.constant 0 : index
    %c0_30 = arith.constant 0 : index
    %12 = vector.load %arg1[%c0_26, %c0_27, %c1_28, %c0_29, %c0_30] : memref<1x4x9x9x4xf32, #tpu.memory_space<vmem>>, vector<1x1x8x8x4xf32>
    %13 = vector.shape_cast %12 : vector<1x1x8x8x4xf32> to vector<8x8x4xf32>
    %c0_31 = arith.constant 0 : index
    %c1_32 = arith.constant 1 : index
    %c1_33 = arith.constant 1 : index
    %c0_34 = arith.constant 0 : index
    %c0_35 = arith.constant 0 : index
    %14 = vector.load %arg1[%c0_31, %c1_32, %c1_33, %c0_34, %c0_35] : memref<1x4x9x9x4xf32, #tpu.memory_space<vmem>>, vector<1x1x8x8x4xf32>
    %15 = vector.shape_cast %14 : vector<1x1x8x8x4xf32> to vector<8x8x4xf32>
    %c0_36 = arith.constant 0 : index
    %c0_37 = arith.constant 0 : index
    %c1_38 = arith.constant 1 : index
    %c1_39 = arith.constant 1 : index
    %c0_40 = arith.constant 0 : index
    %16 = vector.load %arg1[%c0_36, %c0_37, %c1_38, %c1_39, %c0_40] : memref<1x4x9x9x4xf32, #tpu.memory_space<vmem>>, vector<1x1x8x8x4xf32>
    %17 = vector.shape_cast %16 : vector<1x1x8x8x4xf32> to vector<8x8x4xf32>
    %cst = arith.constant 0.000000e+00 : f32
    %18 = vector.broadcast %cst : f32 to vector<8x8x4xf32>
    %19 = tpu.concatenate %1, %3, %5, %7, %9, %11, %13, %15, %17, %18 in 2 : vector<8x8x4xf32>, vector<8x8x4xf32>, vector<8x8x4xf32>, vector<8x8x4xf32>, vector<8x8x4xf32>, vector<8x8x4xf32>, vector<8x8x4xf32>, vector<8x8x4xf32>, vector<8x8x4xf32>, vector<8x8x4xf32> -> vector<8x8x40xf32>
    %20 = vector.shape_cast %19 : vector<8x8x40xf32> to vector<64x40xf32>
    %c0_41 = arith.constant 0 : index
    %c0_42 = arith.constant 0 : index
    %21 = vector.load %arg2[%c0_41, %c0_42] : memref<40x128xf32, #tpu.memory_space<vmem>>, vector<40x128xf32>
    %cst_43 = arith.constant dense<0.000000e+00> : vector<64x128xf32>
    %22 = tpu.matmul %20, %21, %cst_43 {dimension_numbers = #tpu.dot_dimension_numbers<[1], [0], [0], [1], [0, 0, 1, 1], [], []>} : vector<64x40xf32>, vector<40x128xf32>, vector<64x128xf32> -> vector<64x128xf32>
    %c0_44 = arith.constant 0 : index
    %c0_45 = arith.constant 0 : index
    %23 = vector.load %arg3[%c0_44, %c0_45] : memref<1x128xf32, #tpu.memory_space<vmem>>, vector<1x128xf32>
    %24 = vector.broadcast %23 : vector<1x128xf32> to vector<64x128xf32>
    %25 = arith.addf %22, %24 : vector<64x128xf32>
    %cst_46 = arith.constant 0.000000e+00 : f32
    %26 = vector.broadcast %cst_46 : f32 to vector<64x128xf32>
    %27 = arith.maximumf %25, %26 : vector<64x128xf32>
    %cst_47 = arith.constant dense<0.000000e+00> : vector<128xf32>
    %28 = vector.multi_reduction <add>, %27, %cst_47 [0] : vector<64x128xf32> to vector<128xf32>
    %29 = vector.shape_cast %28 : vector<128xf32> to vector<1x128xf32>
    %c0_48 = arith.constant 0 : index
    %c0_49 = arith.constant 0 : index
    %c0_50 = arith.constant 0 : index
    %30 = vector.load %arg4[%c0_48, %c0_49, %c0_50] : memref<1x2x128xf32, #tpu.memory_space<vmem>>, vector<1x1x128xf32>
    %31 = vector.shape_cast %30 : vector<1x1x128xf32> to vector<1x128xf32>
    %32 = vector.shape_cast %29 : vector<1x128xf32> to vector<1x1x128xf32>
    tpu.vector_store %arg4[%c0_48, %c0_49, %c0_50], %32 {strides = array<i32>} : memref<1x2x128xf32, #tpu.memory_space<vmem>>, vector<1x1x128xf32>,
    %33 = arith.mulf %27, %27 : vector<64x128xf32>
    %cst_51 = arith.constant dense<0.000000e+00> : vector<128xf32>
    %34 = vector.multi_reduction <add>, %33, %cst_51 [0] : vector<64x128xf32> to vector<128xf32>
    %35 = vector.shape_cast %34 : vector<128xf32> to vector<1x128xf32>
    %c0_52 = arith.constant 0 : index
    %c1_53 = arith.constant 1 : index
    %c0_54 = arith.constant 0 : index
    %36 = vector.load %arg4[%c0_52, %c1_53, %c0_54] : memref<1x2x128xf32, #tpu.memory_space<vmem>>, vector<1x1x128xf32>
    %37 = vector.shape_cast %36 : vector<1x1x128xf32> to vector<1x128xf32>
    %38 = vector.shape_cast %35 : vector<1x128xf32> to vector<1x1x128xf32>
    tpu.vector_store %arg4[%c0_52, %c1_53, %c0_54], %38 {strides = array<i32>} : memref<1x2x128xf32, #tpu.memory_space<vmem>>, vector<1x1x128xf32>,
    return
  }
  func.func @transform_0(%arg0: i32) -> (i32, i32, i32, i32, i32) {
    %c0_i32 = arith.constant 0 : i32
    %c0_i32_0 = arith.constant 0 : i32
    %c0_i32_1 = arith.constant 0 : i32
    %c0_i32_2 = arith.constant 0 : i32
    %c0_i32_3 = arith.constant 0 : i32
    return %arg0, %c0_i32, %c0_i32_0, %c0_i32_1, %c0_i32_2 : i32, i32, i32, i32, i32
  }
  func.func @transform_1(%arg0: i32) -> (i32, i32) {
    %c0_i32 = arith.constant 0 : i32
    %c0_i32_0 = arith.constant 0 : i32
    %c0_i32_1 = arith.constant 0 : i32
    return %c0_i32, %c0_i32_0 : i32, i32
  }
  func.func @transform_2(%arg0: i32) -> (i32, i32) {
    %c0_i32 = arith.constant 0 : i32
    %c0_i32_0 = arith.constant 0 : i32
    %c0_i32_1 = arith.constant 0 : i32
    return %c0_i32, %c0_i32_0 : i32, i32
  }
  func.func @transform_3(%arg0: i32) -> (i32, i32, i32) {
    %c0_i32 = arith.constant 0 : i32
    %c0_i32_0 = arith.constant 0 : i32
    %c0_i32_1 = arith.constant 0 : i32
    return %arg0, %c0_i32, %c0_i32_0 : i32, i32, i32
  }
}

</mosaic_0001>

<llo_original>
// kernel: tpu_custom_call.1
$region0: #{tpu_custom_call.1}
  #allocation0 [shape = 'u32[]', space=smem, size = 0x4, offset = 0x4, fixed_abs, tag = 'smem constant byte address 0x4 - core index']
  #allocation1 [shape = 'u32[144,128]{1,0:T(1,128)}', space=vmem, size = 0x12000, scoped, tag = 'internal scratch']
  %s0 = inlined_call_operand.vmem [shape: f32[2,4,9,9,4], index: 0, kind: input, shape index: {}]
  %s1 = inlined_call_operand.vmem [shape: f32[40,128], index: 1, kind: input, shape index: {}]
  %s2 = inlined_call_operand.vmem [shape: f32[1,128], index: 2, kind: input, shape index: {}]
  %s3 = inlined_call_operand.hbm [shape: f32[2,2,128], index: 3, kind: output, shape index: {}]
  %s4 = sld [smem:[#allocation0]]
  $region45: #{tpu_custom_call.1} parent=0
    _
  %s6 = ssub.s32 1, %s4
  %s7 = scalar_select 0, %s6, %s4
  $region1: #{tpu_custom_call.1} parent=0
    #allocation2 [shape = 'u8[2048]{0}', space=vmem, size = 0x800, scoped, tag = 'output window, operand 0']
    #allocation3 [shape = 's32[2]{0}', space=sflag, size = 0x8, scoped, tag = 'scoped memory for tpu_custom_call.1']
    %8 = vsyncpa [#allocation3], 0
    %s9 = scalar_lea.sflag [#allocation3], 1
    %10 = vsyncpa %s9, 0
    loop: start=0, step=1, limit=4
    $region2: #{tpu_custom_call.1} parent=1 // loop_pre_header
      _
    $region3: #{tpu_custom_call.1} parent=1 // loop_header
      %s12 = sphi 0, %s16
      %p13 = scmp.ge.s32.totalorder %s12, 4
      %s22 = sphi 0, %s24
      %s25 = sphi 0, %s22
      %s26 = sphi 0, %s25
      %s42 = sphi 0, %s26
      %s46 = sphi 0, %s46
      %s48 = sphi 0, %s46
      %s49 = sphi 0, %s48
      %s63 = sphi 0, %s49
      %s67 = sphi 0, %s67
      %s69 = sphi 0, %s67
      %s70 = sphi 0, %s69
      %s84 = sphi 0, %s70
      %s90 = sphi 0, %s92
      %s93 = sphi 0, %s90
      %s94 = sphi 0, %s93
      %s110 = sphi 0, %s94
    $region4: #{tpu_custom_call.1} parent=1 // loop_header_branch
      %15 = sbr.rel (%p13) target = $region8
    $region5: #{tpu_custom_call.1} parent=1 // loop_body
      %s17 = ssub.s32 %s12, 1
      %s18 = ssub.s32 %s12, 2
      %s19 = sadd.s32 %s12, 1
      %s20 = ssub.s32 %s12, %s19
      %p21 = scmp.eq.s32.totalorder %s20, 0
      %s23 = sadd.s32 %s22, 1
      %s24 = scalar_select %p21, %s22, %s23
      %p27 = pneg %p21
      %p28 = scmp.eq.s32.totalorder %s12, 1
      %p29 = por %p27, %p28
      %p30 = scmp.ne.s32.totalorder %s22, %s25
      %p31 = scmp.eq.s32.totalorder %s12, 0
      %p32 = por %p30, %p31
      %p33 = scmp.ne.s32.totalorder %s22, %s25
      %p34 = scmp.eq.s32.totalorder %s17, 1
      %p35 = por %p33, %p34
      %p36 = scmp.ne.s32.totalorder %s25, %s26
      %p37 = scmp.eq.s32.totalorder %s17, 0
      %p38 = por %p36, %p37
      %p39 = scmp.ne.s32.totalorder %s25, %s26
      %p40 = scmp.eq.s32.totalorder %s18, 1
      %p41 = por %p39, %p40
      %p43 = scmp.ne.s32.totalorder %s26, %s42
      %p44 = scmp.eq.s32.totalorder %s18, 0
      %p45 = por %p43, %p44
      %s47 = sadd.s32 %s46, 1
      %p50 = scmp.eq.s32.totalorder %s12, 1
      %p51 = scmp.ne.s32.totalorder %s46, %s48
      %p52 = scmp.eq.s32.totalorder %s12, 0
      %p53 = por %p51, %p52
      %p54 = scmp.ne.s32.totalorder %s46, %s48
      %p55 = scmp.eq.s32.totalorder %s17, 1
      %p56 = por %p54, %p55
      %p57 = scmp.ne.s32.totalorder %s48, %s49
      %p58 = scmp.eq.s32.totalorder %s17, 0
      %p59 = por %p57, %p58
      %p60 = scmp.ne.s32.totalorder %s48, %s49
      %p61 = scmp.eq.s32.totalorder %s18, 1
      %p62 = por %p60, %p61
      %p64 = scmp.ne.s32.totalorder %s49, %s63
      %p65 = scmp.eq.s32.totalorder %s18, 0
      %p66 = por %p64, %p65
      %s68 = sadd.s32 %s67, 1
      %p71 = scmp.eq.s32.totalorder %s12, 1
      %p72 = scmp.ne.s32.totalorder %s67, %s69
      %p73 = scmp.eq.s32.totalorder %s12, 0
      %p74 = por %p72, %p73
      %p75 = scmp.ne.s32.totalorder %s67, %s69
      %p76 = scmp.eq.s32.totalorder %s17, 1
      %p77 = por %p75, %p76
      %p78 = scmp.ne.s32.totalorder %s69, %s70
      %p79 = scmp.eq.s32.totalorder %s17, 0
      %p80 = por %p78, %p79
      %p81 = scmp.ne.s32.totalorder %s69, %s70
      %p82 = scmp.eq.s32.totalorder %s18, 1
      %p83 = por %p81, %p82
      %p85 = scmp.ne.s32.totalorder %s70, %s84
      %p86 = scmp.eq.s32.totalorder %s18, 0
      %p87 = por %p85, %p86
      %s88 = ssub.s32 %s12, %s19
      %p89 = scmp.eq.s32.totalorder %s88, 0
      %s91 = sadd.s32 %s90, 1
      %s92 = scalar_select %p89, %s90, %s91
      %p95 = pneg %p89
      %p96 = scmp.eq.s32.totalorder %s12, 1
      %p97 = por %p95, %p96
      %p98 = scmp.ne.s32.totalorder %s90, %s93
      %p99 = scmp.eq.s32.totalorder %s12, 0
      %p100 = por %p98, %p99
      %p101 = scmp.ne.s32.totalorder %s90, %s93
      %p102 = scmp.eq.s32.totalorder %s17, 1
      %p103 = por %p101, %p102
      %p104 = scmp.ne.s32.totalorder %s93, %s94
      %p105 = scmp.eq.s32.totalorder %s17, 0
      %p106 = por %p104, %p105
      %p107 = scmp.ne.s32.totalorder %s93, %s94
      %p108 = scmp.eq.s32.totalorder %s18, 1
      %p109 = por %p107, %p108
      %p111 = scmp.ne.s32.totalorder %s94, %s110
      %p112 = scmp.eq.s32.totalorder %s18, 0
      %p113 = por %p111, %p112
      %p114 = scmp.le.s32.totalorder 1, %s12
      %p115 = scmp.lt.s32.totalorder %s12, 3
      %p116 = pnand %p114, %p115
      %p117 = pneg %p116
      // Predicated region
      $region9: #{tpu_custom_call.1} parent=5 // pred_check
        _
      $region10: #{tpu_custom_call.1} parent=5 // pred_check_branch
        %119 = sbr.rel (%p116) target = $region12
      $region11: #{tpu_custom_call.1} parent=5 // pred_region
        %s120 = ssub.s32 %s12, 1
        // Predicated region
        $region13: #{tpu_custom_call.1} parent=11 // pred_check
          %p121 = pneg %p59
        $region14: #{tpu_custom_call.1} parent=11 // pred_check_branch
          %123 = sbr.rel (%p121) target = $region16
        $region15: #{tpu_custom_call.1} parent=11 // pred_region
          _
        $region16: #{tpu_custom_call.1} parent=11 // pred_fallthru
          _
        // Predicated region
        $region17: #{tpu_custom_call.1} parent=11 // pred_check
          %p124 = pneg %p80
        $region18: #{tpu_custom_call.1} parent=11 // pred_check_branch
          %126 = sbr.rel (%p124) target = $region20
        $region19: #{tpu_custom_call.1} parent=11 // pred_region
          _
        $region20: #{tpu_custom_call.1} parent=11 // pred_fallthru
          _
      $region12: #{tpu_custom_call.1} parent=5 // pred_fallthru
        _
      %p127 = scmp.lt.s32.totalorder %s12, 2
      // Predicated region
      $region21: #{tpu_custom_call.1} parent=5 // pred_check
        %p128 = pneg %p127
      $region22: #{tpu_custom_call.1} parent=5 // pred_check_branch
        %130 = sbr.rel (%p128) target = $region24
      $region23: #{tpu_custom_call.1} parent=5 // pred_region
        // Predicated region
        $region25: #{tpu_custom_call.1} parent=23 // pred_check
          %p131 = pneg %p32
        $region26: #{tpu_custom_call.1} parent=23 // pred_check_branch
          %133 = sbr.rel (%p131) target = $region28
        $region27: #{tpu_custom_call.1} parent=23 // pred_region
          %p134 = scmp.lt.s32.totalorder %s12, 1
          %s135 = scalar_select %p134, %s12, 1
          %s136 = smul.addr %s135, 72
          %s137 = smul.addr %s136, 8
          %s138 = scalar_lea.vmem %s0, %s137
        $region28: #{tpu_custom_call.1} parent=23 // pred_fallthru
          _
      $region24: #{tpu_custom_call.1} parent=5 // pred_fallthru
        _
      %p139 = scmp.le.s32.totalorder 1, %s12
      %p140 = scmp.lt.s32.totalorder %s12, 3
      %p141 = pnand %p139, %p140
      %p142 = pneg %p141
      // Predicated region
      $region29: #{tpu_custom_call.1} parent=5 // pred_check
        _
      $region30: #{tpu_custom_call.1} parent=5 // pred_check_branch
        %144 = sbr.rel (%p141) target = $region32
      $region31: #{tpu_custom_call.1} parent=5 // pred_region
        %s145 = ssub.s32 %s12, 1
        %p146 = scmp.lt.s32.totalorder %s17, 1
        %s147 = scalar_select %p146, %s17, 1
        %s148 = smul.addr %s147, 72
        %s149 = smul.addr %s148, 8
        %s150 = scalar_lea.vmem %s0, %s149
        %p151 = pneg %p38
        %p152 = pneg %p35
        %p153 = pneg %p59
        %p154 = pneg %p56
        %p155 = pneg %p80
        %p156 = pneg %p77
        %p157 = pneg %p106
        %p158 = pneg %p103
        %s159 = sand.u32 %s93, 1
        %s160 = scalar_lea.sflag [#allocation3], %s159
        %s161 = sand.u32 %s93, 1
        %s162 = smul.addr %s161, 2
        %s163 = scalar_lea.vmem [#allocation2], %s162
        %p164 = scmp.lt.s32.totalorder %s17, 1
        %s165 = scalar_select %p164, %s17, 1
        %s166 = smul.addr %s165, 72
        %s167 = smul.addr %s166, 8
        %s168 = scalar_lea.vmem %s0, %s167
        %v169 = vld [vmem:[%s168] sm:$0xff]
        %v170 = vld [vmem:[%s168 + $0x10] sm:$0xff]
        %v171 = vld [vmem:[%s168 + $0x20] sm:$0xff]
        %v172 = vld [vmem:[%s168 + $0x30] sm:$0xff]
        %v173 = vld [vmem:[%s168 + $0x40] sm:$0xff]
        %v174 = vld [vmem:[%s168 + $0x50] sm:$0xff]
        %v175 = vld [vmem:[%s168 + $0x60] sm:$0xff]
        %v176 = vld [vmem:[%s168 + $0x70] sm:$0xff]
        %s177 = scalar_lea.vmem %s168, 144
        %v178 = vld [vmem:[%s177] sm:$0xff]
        %v179 = vld [vmem:[%s177 + $0x10] sm:$0xff]
        %v180 = vld [vmem:[%s177 + $0x20] sm:$0xff]
        %v181 = vld [vmem:[%s177 + $0x30] sm:$0xff]
        %v182 = vld [vmem:[%s177 + $0x40] sm:$0xff]
        %v183 = vld [vmem:[%s177 + $0x50] sm:$0xff]
        %v184 = vld [vmem:[%s177 + $0x60] sm:$0xff]
        %v185 = vld [vmem:[%s177 + $0x70] sm:$0xff]
        %v186 = vld [vmem:[%s168 + $0x1] sm:$0xff]
        %v187 = vld [vmem:[%s168 + $0x11] sm:$0xff]
        %v188 = vld [vmem:[%s168 + $0x21] sm:$0xff]
        %v189 = vld [vmem:[%s168 + $0x31] sm:$0xff]
        %v190 = vld [vmem:[%s168 + $0x41] sm:$0xff]
        %v191 = vld [vmem:[%s168 + $0x51] sm:$0xff]
        %v192 = vld [vmem:[%s168 + $0x61] sm:$0xff]
        %v193 = vld [vmem:[%s168 + $0x71] sm:$0xff]
        %s194 = scalar_lea.vmem %s168, 288
        %v195 = vld [vmem:[%s194] sm:$0xff]
        %v196 = vld [vmem:[%s194 + $0x10] sm:$0xff]
        %v197 = vld [vmem:[%s194 + $0x20] sm:$0xff]
        %v198 = vld [vmem:[%s194 + $0x30] sm:$0xff]
        %v199 = vld [vmem:[%s194 + $0x40] sm:$0xff]
        %v200 = vld [vmem:[%s194 + $0x50] sm:$0xff]
        %v201 = vld [vmem:[%s194 + $0x60] sm:$0xff]
        %v202 = vld [vmem:[%s194 + $0x70] sm:$0xff]
        %s203 = scalar_lea.vmem %s168, 432
        %v204 = vld [vmem:[%s203] sm:$0xff]
        %v205 = vld [vmem:[%s203 + $0x10] sm:$0xff]
        %v206 = vld [vmem:[%s203 + $0x20] sm:$0xff]
        %v207 = vld [vmem:[%s203 + $0x30] sm:$0xff]
        %v208 = vld [vmem:[%s203 + $0x40] sm:$0xff]
        %v209 = vld [vmem:[%s203 + $0x50] sm:$0xff]
        %v210 = vld [vmem:[%s203 + $0x60] sm:$0xff]
        %v211 = vld [vmem:[%s203 + $0x70] sm:$0xff]
        %v212 = vld [vmem:[%s194 + $0x1] sm:$0xff]
        %v213 = vld [vmem:[%s194 + $0x11] sm:$0xff]
        %v214 = vld [vmem:[%s194 + $0x21] sm:$0xff]
        %v215 = vld [vmem:[%s194 + $0x31] sm:$0xff]
        %v216 = vld [vmem:[%s194 + $0x41] sm:$0xff]
        %v217 = vld [vmem:[%s194 + $0x51] sm:$0xff]
        %v218 = vld [vmem:[%s194 + $0x61] sm:$0xff]
        %v219 = vld [vmem:[%s194 + $0x71] sm:$0xff]
        %s220 = scalar_lea.vmem %s168, 16
        %v221 = vld [vmem:[%s220] sm:$0xff]
        %v222 = vld [vmem:[%s220 + $0x10] sm:$0xff]
        %v223 = vld [vmem:[%s220 + $0x20] sm:$0xff]
        %v224 = vld [vmem:[%s220 + $0x30] sm:$0xff]
        %v225 = vld [vmem:[%s220 + $0x40] sm:$0xff]
        %v226 = vld [vmem:[%s220 + $0x50] sm:$0xff]
        %v227 = vld [vmem:[%s220 + $0x60] sm:$0xff]
        %v228 = vld [vmem:[%s220 + $0x70] sm:$0xff]
        %s229 = scalar_lea.vmem %s168, 160
        %v230 = vld [vmem:[%s229] sm:$0xff]
        %v231 = vld [vmem:[%s229 + $0x10] sm:$0xff]
        %v232 = vld [vmem:[%s229 + $0x20] sm:$0xff]
        %v233 = vld [vmem:[%s229 + $0x30] sm:$0xff]
        %v234 = vld [vmem:[%s229 + $0x40] sm:$0xff]
        %v235 = vld [vmem:[%s229 + $0x50] sm:$0xff]
        %v236 = vld [vmem:[%s229 + $0x60] sm:$0xff]
        %v237 = vld [vmem:[%s229 + $0x70] sm:$0xff]
        %v238 = vld [vmem:[%s220 + $0x1] sm:$0xff]
        %v239 = vld [vmem:[%s220 + $0x11] sm:$0xff]
        %v240 = vld [vmem:[%s220 + $0x21] sm:$0xff]
        %v241 = vld [vmem:[%s220 + $0x31] sm:$0xff]
        %v242 = vld [vmem:[%s220 + $0x41] sm:$0xff]
        %v243 = vld [vmem:[%s220 + $0x51] sm:$0xff]
        %v244 = vld [vmem:[%s220 + $0x61] sm:$0xff]
        %v245 = vld [vmem:[%s220 + $0x71] sm:$0xff]
        %254 = vrot.lane.b32.xlu0 %v178, 4
        %v255 = vpop.permute.xlu0 %254
        %256 = vrot.lane.b32.xlu0 %v179, 4
        %v257 = vpop.permute.xlu0 %256
        %258 = vrot.lane.b32.xlu0 %v180, 4
        %v259 = vpop.permute.xlu0 %258
        %260 = vrot.lane.b32.xlu0 %v181, 4
        %v261 = vpop.permute.xlu0 %260
        %262 = vrot.lane.b32.xlu0 %v182, 4
        %v263 = vpop.permute.xlu0 %262
        %264 = vrot.lane.b32.xlu0 %v183, 4
        %v265 = vpop.permute.xlu0 %264
        %266 = vrot.lane.b32.xlu0 %v184, 4
        %v267 = vpop.permute.xlu0 %266
        %268 = vrot.lane.b32.xlu0 %v185, 4
        %v269 = vpop.permute.xlu0 %268
        %286 = vrot.lane.b32.xlu0 %v186, 8
        %v287 = vpop.permute.xlu0 %286
        %288 = vrot.lane.b32.xlu0 %v187, 8
        %v289 = vpop.permute.xlu0 %288
        %290 = vrot.lane.b32.xlu0 %v188, 8
        %v291 = vpop.permute.xlu0 %290
        %292 = vrot.lane.b32.xlu0 %v189, 8
        %v293 = vpop.permute.xlu0 %292
        %294 = vrot.lane.b32.xlu0 %v190, 8
        %v295 = vpop.permute.xlu0 %294
        %296 = vrot.lane.b32.xlu0 %v191, 8
        %v297 = vpop.permute.xlu0 %296
        %298 = vrot.lane.b32.xlu0 %v192, 8
        %v299 = vpop.permute.xlu0 %298
        %300 = vrot.lane.b32.xlu0 %v193, 8
        %v301 = vpop.permute.xlu0 %300
        %318 = vrot.lane.b32.xlu0 %v195, 12
        %v319 = vpop.permute.xlu0 %318
        %320 = vrot.lane.b32.xlu0 %v196, 12
        %v321 = vpop.permute.xlu0 %320
        %322 = vrot.lane.b32.xlu0 %v197, 12
        %v323 = vpop.permute.xlu0 %322
        %324 = vrot.lane.b32.xlu0 %v198, 12
        %v325 = vpop.permute.xlu0 %324
        %326 = vrot.lane.b32.xlu0 %v199, 12
        %v327 = vpop.permute.xlu0 %326
        %328 = vrot.lane.b32.xlu0 %v200, 12
        %v329 = vpop.permute.xlu0 %328
        %330 = vrot.lane.b32.xlu0 %v201, 12
        %v331 = vpop.permute.xlu0 %330
        %332 = vrot.lane.b32.xlu0 %v202, 12
        %v333 = vpop.permute.xlu0 %332
        %350 = vrot.lane.b32.xlu0 %v204, 16
        %v351 = vpop.permute.xlu0 %350
        %352 = vrot.lane.b32.xlu0 %v205, 16
        %v353 = vpop.permute.xlu0 %352
        %354 = vrot.lane.b32.xlu0 %v206, 16
        %v355 = vpop.permute.xlu0 %354
        %356 = vrot.lane.b32.xlu0 %v207, 16
        %v357 = vpop.permute.xlu0 %356
        %358 = vrot.lane.b32.xlu0 %v208, 16
        %v359 = vpop.permute.xlu0 %358
        %360 = vrot.lane.b32.xlu0 %v209, 16
        %v361 = vpop.permute.xlu0 %360
        %362 = vrot.lane.b32.xlu0 %v210, 16
        %v363 = vpop.permute.xlu0 %362
        %364 = vrot.lane.b32.xlu0 %v211, 16
        %v365 = vpop.permute.xlu0 %364
        %382 = vrot.lane.b32.xlu0 %v212, 20
        %v383 = vpop.permute.xlu0 %382
        %384 = vrot.lane.b32.xlu0 %v213, 20
        %v385 = vpop.permute.xlu0 %384
        %386 = vrot.lane.b32.xlu0 %v214, 20
        %v387 = vpop.permute.xlu0 %386
        %388 = vrot.lane.b32.xlu0 %v215, 20
        %v389 = vpop.permute.xlu0 %388
        %390 = vrot.lane.b32.xlu0 %v216, 20
        %v391 = vpop.permute.xlu0 %390
        %392 = vrot.lane.b32.xlu0 %v217, 20
        %v393 = vpop.permute.xlu0 %392
        %394 = vrot.lane.b32.xlu0 %v218, 20
        %v395 = vpop.permute.xlu0 %394
        %396 = vrot.lane.b32.xlu0 %v219, 20
        %v397 = vpop.permute.xlu0 %396
        %414 = vrot.lane.b32.xlu0 %v221, 24
        %v415 = vpop.permute.xlu0 %414
        %416 = vrot.lane.b32.xlu0 %v222, 24
        %v417 = vpop.permute.xlu0 %416
        %418 = vrot.lane.b32.xlu0 %v223, 24
        %v419 = vpop.permute.xlu0 %418
        %420 = vrot.lane.b32.xlu0 %v224, 24
        %v421 = vpop.permute.xlu0 %420
        %422 = vrot.lane.b32.xlu0 %v225, 24
        %v423 = vpop.permute.xlu0 %422
        %424 = vrot.lane.b32.xlu0 %v226, 24
        %v425 = vpop.permute.xlu0 %424
        %426 = vrot.lane.b32.xlu0 %v227, 24
        %v427 = vpop.permute.xlu0 %426
        %428 = vrot.lane.b32.xlu0 %v228, 24
        %v429 = vpop.permute.xlu0 %428
        %446 = vrot.lane.b32.xlu0 %v230, 28
        %v447 = vpop.permute.xlu0 %446
        %448 = vrot.lane.b32.xlu0 %v231, 28
        %v449 = vpop.permute.xlu0 %448
        %450 = vrot.lane.b32.xlu0 %v232, 28
        %v451 = vpop.permute.xlu0 %450
        %452 = vrot.lane.b32.xlu0 %v233, 28
        %v453 = vpop.permute.xlu0 %452
        %454 = vrot.lane.b32.xlu0 %v234, 28
        %v455 = vpop.permute.xlu0 %454
        %456 = vrot.lane.b32.xlu0 %v235, 28
        %v457 = vpop.permute.xlu0 %456
        %458 = vrot.lane.b32.xlu0 %v236, 28
        %v459 = vpop.permute.xlu0 %458
        %460 = vrot.lane.b32.xlu0 %v237, 28
        %v461 = vpop.permute.xlu0 %460
        %478 = vrot.lane.b32.xlu0 %v238, 32
        %v479 = vpop.permute.xlu0 %478
        %480 = vrot.lane.b32.xlu0 %v239, 32
        %v481 = vpop.permute.xlu0 %480
        %482 = vrot.lane.b32.xlu0 %v240, 32
        %v483 = vpop.permute.xlu0 %482
        %484 = vrot.lane.b32.xlu0 %v241, 32
        %v485 = vpop.permute.xlu0 %484
        %486 = vrot.lane.b32.xlu0 %v242, 32
        %v487 = vpop.permute.xlu0 %486
        %488 = vrot.lane.b32.xlu0 %v243, 32
        %v489 = vpop.permute.xlu0 %488
        %490 = vrot.lane.b32.xlu0 %v244, 32
        %v491 = vpop.permute.xlu0 %490
        %492 = vrot.lane.b32.xlu0 %v245, 32
        %v493 = vpop.permute.xlu0 %492
        %vm502 = vcmask 31744
        %v503 = vsel %vm502, %v169, %v255
        %v504 = vsel %vm502, %v170, %v257
        %v505 = vsel %vm502, %v171, %v259
        %v506 = vsel %vm502, %v172, %v261
        %v507 = vsel %vm502, %v173, %v263
        %v508 = vsel %vm502, %v174, %v265
        %v509 = vsel %vm502, %v175, %v267
        %v510 = vsel %vm502, %v176, %v269
        %vm511 = vcmask 64512
        %v512 = vsel %vm511, %v503, %v287
        %v513 = vsel %vm511, %v504, %v289
        %v514 = vsel %vm511, %v505, %v291
        %v515 = vsel %vm511, %v506, %v293
        %v516 = vsel %vm511, %v507, %v295
        %v517 = vsel %vm511, %v508, %v297
        %v518 = vsel %vm511, %v509, %v299
        %v519 = vsel %vm511, %v510, %v301
        %vm520 = vcmask 97280
        %v521 = vsel %vm520, %v512, %v319
        %v522 = vsel %vm520, %v513, %v321
        %v523 = vsel %vm520, %v514, %v323
        %v524 = vsel %vm520, %v515, %v325
        %v525 = vsel %vm520, %v516, %v327
        %v526 = vsel %vm520, %v517, %v329
        %v527 = vsel %vm520, %v518, %v331
        %v528 = vsel %vm520, %v519, %v333
        %vm529 = vcmask 130048
        %v530 = vsel %vm529, %v521, %v351
        %v531 = vsel %vm529, %v522, %v353
        %v532 = vsel %vm529, %v523, %v355
        %v533 = vsel %vm529, %v524, %v357
        %v534 = vsel %vm529, %v525, %v359
        %v535 = vsel %vm529, %v526, %v361
        %v536 = vsel %vm529, %v527, %v363
        %v537 = vsel %vm529, %v528, %v365
        %vm538 = vcmask 162816
        %v539 = vsel %vm538, %v530, %v383
        %v540 = vsel %vm538, %v531, %v385
        %v541 = vsel %vm538, %v532, %v387
        %v542 = vsel %vm538, %v533, %v389
        %v543 = vsel %vm538, %v534, %v391
        %v544 = vsel %vm538, %v535, %v393
        %v545 = vsel %vm538, %v536, %v395
        %v546 = vsel %vm538, %v537, %v397
        %vm547 = vcmask 195584
        %v548 = vsel %vm547, %v539, %v415
        %v549 = vsel %vm547, %v540, %v417
        %v550 = vsel %vm547, %v541, %v419
        %v551 = vsel %vm547, %v542, %v421
        %v552 = vsel %vm547, %v543, %v423
        %v553 = vsel %vm547, %v544, %v425
        %v554 = vsel %vm547, %v545, %v427
        %v555 = vsel %vm547, %v546, %v429
        %vm556 = vcmask 228352
        %v557 = vsel %vm556, %v548, %v447
        %v558 = vsel %vm556, %v549, %v449
        %v559 = vsel %vm556, %v550, %v451
        %v560 = vsel %vm556, %v551, %v453
        %v561 = vsel %vm556, %v552, %v455
        %v562 = vsel %vm556, %v553, %v457
        %v563 = vsel %vm556, %v554, %v459
        %v564 = vsel %vm556, %v555, %v461
        %vm565 = vcmask 261120
        %v566 = vsel %vm565, %v557, %v479
        %v567 = vsel %vm565, %v558, %v481
        %v568 = vsel %vm565, %v559, %v483
        %v569 = vsel %vm565, %v560, %v485
        %v570 = vsel %vm565, %v561, %v487
        %v571 = vsel %vm565, %v562, %v489
        %v572 = vsel %vm565, %v563, %v491
        %v573 = vsel %vm565, %v564, %v493
        %vm574 = vcmask 293888
        %v575 = vsel %vm574, %v566, 0.0
        %v576 = vsel %vm574, %v567, 0.0
        %v577 = vsel %vm574, %v568, 0.0
        %v578 = vsel %vm574, %v569, 0.0
        %v579 = vsel %vm574, %v570, 0.0
        %v580 = vsel %vm574, %v571, 0.0
        %v581 = vsel %vm574, %v572, 0.0
        %v582 = vsel %vm574, %v573, 0.0
        %v583 = vld [vmem:[%s1] sm:$0xff]
        %v584 = vld [vmem:[%s1 + $0x8] sm:$0xff]
        %v585 = vld [vmem:[%s1 + $0x10] sm:$0xff]
        %v586 = vld [vmem:[%s1 + $0x18] sm:$0xff]
        %v587 = vld [vmem:[%s1 + $0x20] sm:$0xff]
        %v588 = vld [vmem:[%s2] sm:$0x1]
        %v590 = vlaneseq
        %v591 = vshrl.u32 %v590, 7
        %v592 = vsub.s32 0, %v591
        %v593 = vrot.slane %v588, %v592
        %vm595 = vcmask 326656
        %v597 = vsel %vm595, %v575, 0
        %v600 = vsel %vm595, %v576, 0
        %v603 = vsel %vm595, %v577, 0
        %v606 = vsel %vm595, %v578, 0
        %v609 = vsel %vm595, %v579, 0
        %v612 = vsel %vm595, %v580, 0
        %v615 = vsel %vm595, %v581, 0
        %v618 = vsel %vm595, %v582, 0
        %620 = vmatprep.subr.mxu0 0.0
        %621 = vmatpush1.msra.mxu0 %v583
        %622 = vmatprep.subr.mxu0 0.0
        %623 = vmatpush1.msra.mxu0 %v584
        %624 = vmatprep.subr.mxu0 0.0
        %625 = vmatpush1.msra.mxu0 %v585
        %626 = vmatprep.subr.mxu0 0.0
        %627 = vmatpush1.msra.mxu0 %v586
        %628 = vmatprep.subr.mxu0 0.0
        %629 = vmatpush1.msra.mxu0 %v587
        %630 = vmatprep.subr.mxu0 0.0
        %631 = vmatpush1.msra.mxu0 0.0
        %632 = vmatprep.subr.mxu0 0.0
        %633 = vmatpush1.msra.mxu0 0.0
        %634 = vmatprep.subr.mxu0 0.0
        %635 = vmatpush1.msra.mxu0 0.0
        %636 = vmatprep.subr.mxu0 0.0
        %637 = vmatpush1.msra.mxu0 0.0
        %638 = vmatprep.subr.mxu0 0.0
        %639 = vmatpush1.msra.mxu0 0.0
        %640 = vmatprep.subr.mxu0 0.0
        %641 = vmatpush1.msra.mxu0 0.0
        %642 = vmatprep.subr.mxu0 0.0
        %643 = vmatpush1.msra.mxu0 0.0
        %644 = vmatprep.subr.mxu0 0.0
        %645 = vmatpush1.msra.mxu0 0.0
        %646 = vmatprep.subr.mxu0 0.0
        %647 = vmatpush1.msra.mxu0 0.0
        %648 = vmatprep.subr.mxu0 0.0
        %649 = vmatpush1.msra.mxu0 0.0
        %650 = vmatprep.subr.mxu0 0.0
        %651 = vmatpush1.msra.mxu0 0.0
        %652 = vmatprep.subr.mxu0 0.0
        %653 = vmatpush1.msra.mxu0 0.0
        %654 = vmatprep.subr.mxu0 0.0
        %655 = vmatpush1.msra.mxu0 0.0
        %656 = vmatprep.subr.mxu0 0.0
        %657 = vmatpush1.msra.mxu0 0.0
        %658 = vmatprep.subr.mxu0 0.0
        %659 = vmatpush1.msra.mxu0 0.0
        %660 = vmatprep.subr.mxu0 0.0
        %661 = vmatpush1.msra.mxu0 0.0
        %662 = vmatprep.subr.mxu0 0.0
        %663 = vmatpush1.msra.mxu0 0.0
        %664 = vmatprep.subr.mxu0 0.0
        %665 = vmatpush1.msra.mxu0 0.0
        %666 = vmatprep.subr.mxu0 0.0
        %667 = vmatpush1.msra.mxu0 0.0
        %668 = vmatprep.subr.mxu0 0.0
        %669 = vmatpush1.msra.mxu0 0.0
        %670 = vmatprep.subr.mxu0 0.0
        %671 = vmatpush1.msra.mxu0 0.0
        %672 = vmatprep.subr.mxu0 0.0
        %673 = vmatpush1.msra.mxu0 0.0
        %674 = vmatprep.subr.mxu0 0.0
        %675 = vmatpush1.msra.mxu0 0.0
        %676 = vmatprep.subr.mxu0 0.0
        %677 = vmatpush1.msra.mxu0 0.0
        %678 = vmatprep.subr.mxu0 0.0
        %679 = vmatpush1.msra.mxu0 0.0
        %680 = vmatprep.subr.mxu0 0.0
        %681 = vmatpush1.msra.mxu0 0.0
        %682 = vmatprep.subr.mxu0 0.0
        %683 = vmatpush1.msra.mxu0 0.0
        %684 = vmatprep.mubr.f32.mxu0 0.0
        %685 = vmatmul.mubr.f32.gmra.mrb[0].mxu0 %v597
        %v686 = vpop.f32.mrb[0].mxu0
        %v687 = vadd.f32 %v593, %v686
        %v688 = vpop.f32.mrb[0].mxu0
        %689 = vmatprep.mubr.f32.mxu0 0.0
        %690 = vmatmul.mubr.f32.gmra.mrb[0].mxu0 %v600
        %v691 = vpop.f32.mrb[0].mxu0
        %v692 = vadd.f32 %v593, %v691
        %v693 = vpop.f32.mrb[0].mxu0
        %694 = vmatprep.mubr.f32.mxu0 0.0
        %695 = vmatmul.mubr.f32.gmra.mrb[0].mxu0 %v603
        %v696 = vpop.f32.mrb[0].mxu0
        %v697 = vadd.f32 %v593, %v696
        %v698 = vpop.f32.mrb[0].mxu0
        %699 = vmatprep.mubr.f32.mxu0 0.0
        %700 = vmatmul.mubr.f32.gmra.mrb[0].mxu0 %v606
        %v701 = vpop.f32.mrb[0].mxu0
        %v702 = vadd.f32 %v593, %v701
        %v703 = vpop.f32.mrb[0].mxu0
        %704 = vmatprep.mubr.f32.mxu0 0.0
        %705 = vmatmul.mubr.f32.gmra.mrb[0].mxu0 %v609
        %v706 = vpop.f32.mrb[0].mxu0
        %v707 = vadd.f32 %v593, %v706
        %v708 = vpop.f32.mrb[0].mxu0
        %709 = vmatprep.mubr.f32.mxu0 0.0
        %710 = vmatmul.mubr.f32.gmra.mrb[0].mxu0 %v612
        %v711 = vpop.f32.mrb[0].mxu0
        %v712 = vadd.f32 %v593, %v711
        %v713 = vpop.f32.mrb[0].mxu0
        %714 = vmatprep.mubr.f32.mxu0 0.0
        %715 = vmatmul.mubr.f32.gmra.mrb[0].mxu0 %v615
        %v716 = vpop.f32.mrb[0].mxu0
        %v717 = vadd.f32 %v593, %v716
        %v718 = vpop.f32.mrb[0].mxu0
        %719 = vmatprep.mubr.f32.mxu0 0.0
        %720 = vmatmul.mubr.f32.gmra.mrb[0].mxu0 %v618
        %v721 = vpop.f32.mrb[0].mxu0
        %v722 = vadd.f32 %v593, %v721
        %v723 = vpop.f32.mrb[0].mxu0
        %724 = vdwg.mxu0
        %v725 = vmax.f32 %v687, 0.0
        %v726 = vmax.f32 %v692, 0.0
        %v727 = vmax.f32 %v697, 0.0
        %v728 = vmax.f32 %v702, 0.0
        %v729 = vmax.f32 %v707, 0.0
        %v730 = vmax.f32 %v712, 0.0
        %v731 = vmax.f32 %v717, 0.0
        %v732 = vmax.f32 %v722, 0.0
        %v733 = vadd.f32 %v725, %v726
        %v734 = vadd.f32 %v733, %v727
        %v735 = vadd.f32 %v734, %v728
        %v736 = vadd.f32 %v735, %v729
        %v737 = vadd.f32 %v736, %v730
        %v738 = vadd.f32 %v737, %v731
        %v739 = vadd.f32 %v738, %v732
        %v740 = vrot.slane %v739, 4
        %v741 = vadd.f32 %v739, %v740
        %v742 = vrot.slane %v741, 2
        %v743 = vadd.f32 %v741, %v742
        %v744 = vrot.slane %v743, 1
        %v745 = vadd.f32 %v743, %v744
        %746 = vst [vmem:[%s163] sm:$0x1] %v745
        %v747 = vmul.f32 %v725, %v725
        %v748 = vmul.f32 %v726, %v726
        %v749 = vmul.f32 %v727, %v727
        %v750 = vmul.f32 %v728, %v728
        %v751 = vmul.f32 %v729, %v729
        %v752 = vmul.f32 %v730, %v730
        %v753 = vmul.f32 %v731, %v731
        %v754 = vmul.f32 %v732, %v732
        %v755 = vadd.f32 %v747, %v748
        %v756 = vadd.f32 %v755, %v749
        %v757 = vadd.f32 %v756, %v750
        %v758 = vadd.f32 %v757, %v751
        %v759 = vadd.f32 %v758, %v752
        %v760 = vadd.f32 %v759, %v753
        %v761 = vadd.f32 %v760, %v754
        %v762 = vrot.slane %v761, 4
        %v763 = vadd.f32 %v761, %v762
        %v764 = vrot.slane %v763, 2
        %v765 = vadd.f32 %v763, %v764
        %v766 = vrot.slane %v765, 1
        %v767 = vadd.f32 %v765, %v766
        %768 = vst [vmem:[%s163 + $0x1] sm:$0x1] %v767
        %s769 = sand.u32 %s93, 1
        %s770 = scalar_lea.sflag [#allocation3], %s769
        %s771 = sand.u32 %s93, 1
        %s772 = smul.addr %s771, 2
        %s773 = scalar_lea.vmem [#allocation2], %s772
        // Predicated region
        $region33: #{tpu_custom_call.1} parent=31 // pred_check
          %p774 = pneg %p103
        $region34: #{tpu_custom_call.1} parent=31 // pred_check_branch
          %776 = sbr.rel (%p774) target = $region36
        $region35: #{tpu_custom_call.1} parent=31 // pred_region
          %s778 = ssub.s32 32, 32
          %779 = vsyncadd %s770, %s778
          %s780 = smul.addr %s17, 32
          %s781 = scalar_lea.hbm %s3, %s780
          %s783 = sshll.u32 %s773, 4
          %s784 = int_to_ptr.vmem [resolvable:$true] %s783
          %786 = dma.vmem_to_hbm [thread:$0]  %s784, 32, %s781, %s770
        $region36: #{tpu_custom_call.1} parent=31 // pred_fallthru
          _
      $region32: #{tpu_custom_call.1} parent=5 // pred_fallthru
        _
      %p787 = scmp.le.s32.totalorder 2, %s12
      // Predicated region
      $region37: #{tpu_custom_call.1} parent=5 // pred_check
        %p788 = pneg %p787
      $region38: #{tpu_custom_call.1} parent=5 // pred_check_branch
        %790 = sbr.rel (%p788) target = $region40
      $region39: #{tpu_custom_call.1} parent=5 // pred_region
        %s791 = ssub.s32 %s12, 2
        // Predicated region
        $region41: #{tpu_custom_call.1} parent=39 // pred_check
          %p792 = pneg %p109
        $region42: #{tpu_custom_call.1} parent=39 // pred_check_branch
          %794 = sbr.rel (%p792) target = $region44
        $region43: #{tpu_custom_call.1} parent=39 // pred_region
          %s795 = sand.u32 %s94, 1
          %s796 = scalar_lea.sflag [#allocation3], %s795
          %s797 = sand.u32 %s94, 1
          %s798 = smul.addr %s797, 2
          %s799 = scalar_lea.vmem [#allocation2], %s798
          %800 = dma.done %s796, 32
        $region44: #{tpu_custom_call.1} parent=39 // pred_fallthru
          _
      $region40: #{tpu_custom_call.1} parent=5 // pred_fallthru
        _
    $region6: #{tpu_custom_call.1} parent=1 // loop_footer
      %s16 = sadd.s32 1, %s12
    $region7: #{tpu_custom_call.1} parent=1 // loop_footer_branch
      %11 = sbr.rel target = $region3
    $region8: #{tpu_custom_call.1} parent=1 // loop_exit
      _
    %801 = vsyncpa [#allocation3], 1
    %s802 = scalar_lea.sflag [#allocation3], 1
    %803 = vsyncpa %s802, 1

</llo_original>
